<compile_context>
chip_gen: v6e
topology: v6e:2x2x1
jax: 0.10.0
libtpu: 0.0.40
codegen_flags: <defaults>
</compile_context>

<pallas_src>
import jax
import jax.numpy as jnp
from jax.experimental import pallas as pl
from jax.experimental.pallas import tpu as pltpu

HIDDEN = 32   # hidden_size (encoder feature dim)
OUTPUT = 32   # output_size (LSTM hidden dim)
VOCAB = 32    # vocab_size
SEQ = 8       # number of encoder steps

O, H, V, S = OUTPUT, HIDDEN, VOCAB, SEQ


def _round_up(x, m):
    return ((x + m - 1) // m) * m


# ---- static packing layout --------------------------------------------------
LANES = 128            # lane width of the slab / token row / packed output row
KHI = O + V            # width of the [h_prev | inp] gate-matmul operand = 64
NG = 4 * O             # LSTM gate width = 128
assert NG == LANES
assert V + 2 * O + 32 == LANES          # packed output = 4 x 32-lane pieces
assert H + 32 <= LANES and S <= 32      # [attw | 0] fits in a 32-lane piece

# weight-slab rows (packed once, outside the decode loop):
ROW_W_HI = 0                      # rows [0, 64)    : W for [h_prev | inp]   (KHI, NG)
ROW_W_CTX = KHI                   # rows [64, 96)   : W for ctx              (H, NG)
ROW_B = ROW_W_CTX + H             # row 96          : b_ih + b_hh            (1, NG)
                                  # row 97          : final bias             (1, V)
                                  # row 98          : attention row (enc part)(1, H)
ROW_FW = _round_up(ROW_B + 8, 8)  # rows [104, 136) : final weight^T         (O, V)
SLAB_ROWS = _round_up(ROW_FW + O, 8)
assert ROW_B % 8 == 0 and ROW_FW % 8 == 0

# packed output lanes per step: [logits | h | c | attw | 0]
OUT_LOGITS, OUT_H, OUT_C, OUT_ATTW = 0, V, V + O, V + 2 * O


def _attn_decoder_kernel(wslab_ref, init_ref, enc_ref, inp_ref, out_ref,
                         state_ref, ctx_ref):
    t = pl.program_id(0)

    tail = wslab_ref[ROW_B:ROW_B + 8, :]        # aligned 8-row tail (96..103)

    # ---- one-off prologue: initial state + step-invariant attention --------
    @pl.when(t == 0)
    def _prologue():
        state_ref[...] = jnp.concatenate(
            [init_ref[...], jnp.zeros((1, LANES - 2 * O), jnp.float32)], axis=1)

        enc = enc_ref[...]                                        # (S, H)
        w_att = tail[2:3, 0:H]                                    # (1, H)
        # scores on VPU/XLU: lane reduce -> (S,1) column; softmax along sublanes
        scores = jnp.sum(enc * w_att, axis=1, keepdims=True)      # (S, 1)
        m = jnp.max(scores, axis=0, keepdims=True)
        e = jnp.exp(scores - m)
        attw_col = e / jnp.sum(e, axis=0, keepdims=True)          # (S, 1)
        ctx = jnp.sum(attw_col * enc, axis=0, keepdims=True)      # (1, H)
        # one-off relayout: attw column -> lanes [H, H+S) of a (1, LANES) row
        rows = jax.lax.broadcasted_iota(jnp.int32, (S, LANES), 0)
        cols = jax.lax.broadcasted_iota(jnp.int32, (S, LANES), 1)
        attw_spread = jnp.sum(jnp.where(cols == rows + H, attw_col, 0.0),
                              axis=0, keepdims=True)              # (1, LANES)
        ctx_ref[...] = jnp.concatenate(
            [ctx, jnp.zeros((1, LANES - H), jnp.float32)], axis=1) + attw_spread

    # ---- per-step body ------------------------------------------------------
    ctx_row = ctx_ref[...]                       # [ctx(H) | attw(S) | 0]
    ctx = ctx_row[:, 0:H]                        # (1, H)
    attw_pad = ctx_row[:, H:H + 32]              # (1, 32) = [attw | 0]

    st = state_ref[...]                          # carried [h | c | 0]
    h_prev = st[:, 0:O]
    c_prev = st[:, O:2 * O]
    inp = inp_ref[...][:, 0:V]                   # (1, V)

    b_lstm = tail[0:1, :]                        # (1, NG)
    fin_b = tail[1:2, 0:V]                       # (1, V)
    fin_w = wslab_ref[ROW_FW:ROW_FW + O, :][:, 0:V]   # (O, V)

    # split gate matmul: [h_prev | inp] part + ctx part
    hi = jnp.concatenate([h_prev, inp], axis=1)  # (1, KHI)
    gates = jnp.dot(hi, wslab_ref[ROW_W_HI:ROW_W_HI + KHI, :],
                    preferred_element_type=jnp.float32)
    gates = gates + jnp.dot(ctx, wslab_ref[ROW_W_CTX:ROW_W_CTX + H, :],
                            preferred_element_type=jnp.float32)
    gates = gates + b_lstm                       # (1, NG)

    sg = jax.nn.sigmoid(gates)                   # one full-width EUP pass
    i_g = sg[:, 0 * O:1 * O]
    f_g = sg[:, 1 * O:2 * O]
    o_g = sg[:, 3 * O:4 * O]
    g_g = jnp.tanh(gates[:, 2 * O:3 * O])

    c_new = f_g * c_prev + i_g * g_g
    h_new = o_g * jnp.tanh(c_new)

    logits = jnp.dot(h_new, fin_w, preferred_element_type=jnp.float32) + fin_b

    state_ref[...] = jnp.concatenate(
        [h_new, c_new, jnp.zeros((1, LANES - 2 * O), jnp.float32)], axis=1)
    # single unmasked (1,128) store: [logits | h | c | attw | 0]
    out_ref[...] = jnp.concatenate([logits, h_new, c_new, attw_pad], axis=1)


def pack_weights(params):
    """Pack all parameters into one lane-dense (SLAB_ROWS, 128) f32 slab.

    Loop-invariant: compute ONCE and reuse for every decode call.
    """
    w_ih = params["w_ih"].astype(jnp.float32)    # (4O, H+V): cols [ctx(H) | inp(V)]
    w_hh = params["w_hh"].astype(jnp.float32)    # (4O, O)
    w_hi = jnp.concatenate([w_hh.T, w_ih[:, H:].T], axis=0)      # (KHI, NG)
    w_ctx = w_ih[:, :H].T                                        # (H, NG)
    b_lstm = (params["b_ih"] + params["b_hh"]).astype(jnp.float32).reshape(NG)
    fin_wT = params["final_w"].astype(jnp.float32).T             # (O, V)
    fin_b = params["final_b"].astype(jnp.float32).reshape(V)
    # only the encoder part of attn_w is needed; h-part + bias cancel in softmax
    w_att = params["attn_w"].astype(jnp.float32)[0, O:]          # (H,)

    slab = jnp.zeros((SLAB_ROWS, LANES), jnp.float32)
    slab = slab.at[ROW_W_HI:ROW_W_HI + KHI, 0:NG].set(w_hi)
    slab = slab.at[ROW_W_CTX:ROW_W_CTX + H, 0:NG].set(w_ctx)
    slab = slab.at[ROW_B, 0:NG].set(b_lstm)
    slab = slab.at[ROW_B + 1, 0:V].set(fin_b)
    slab = slab.at[ROW_B + 2, 0:H].set(w_att)
    slab = slab.at[ROW_FW:ROW_FW + O, 0:V].set(fin_wT)
    return slab


def _decode_pallas(wslab, init, enc2, inp_pad):
    T = inp_pad.shape[0]
    return pl.pallas_call(
        _attn_decoder_kernel,
        out_shape=jax.ShapeDtypeStruct((T, 1, LANES), jnp.float32),
        grid_spec=pltpu.PrefetchScalarGridSpec(
            num_scalar_prefetch=0,
            grid=(T,),
            in_specs=[
                pl.BlockSpec((SLAB_ROWS, LANES), lambda t: (0, 0)),   # weights (resident)
                pl.BlockSpec((1, 2 * O), lambda t: (0, 0)),           # initial [h0 | c0]
                pl.BlockSpec((S, H), lambda t: (0, 0)),               # encoder block (resident)
                pl.BlockSpec((None, 1, LANES), lambda t: (t, 0, 0)),  # per-step token row
            ],
            out_specs=pl.BlockSpec((None, 1, LANES), lambda t: (t, 0, 0)),
            scratch_shapes=[
                pltpu.VMEM((1, LANES), jnp.float32),   # carried [h | c]
                pltpu.VMEM((1, LANES), jnp.float32),   # cached [ctx | attw]
            ],
        ),
        compiler_params=pltpu.CompilerParams(
            dimension_semantics=("arbitrary",)),       # sequential: state carried
    )(wslab, init, enc2, inp_pad)


def attention_decoder_decode(wslab, decoder_hidden, encoder_outputs, inputs):
    """Run T decode steps in ONE pallas_call (teacher-forced inputs (T, V))."""
    T = inputs.shape[0]
    h0 = decoder_hidden[0].reshape(1, O).astype(jnp.float32)
    c0 = decoder_hidden[1].reshape(1, O).astype(jnp.float32)
    enc2 = encoder_outputs.reshape(S, H).astype(jnp.float32)
    init = jnp.concatenate([h0, c0], axis=1)                     # (1, 2O)
    inp_pad = jnp.pad(inputs.reshape(T, 1, V).astype(jnp.float32),
                      ((0, 0), (0, 0), (0, LANES - V)))

    packed = _decode_pallas(wslab, init, enc2, inp_pad)          # (T, 1, LANES)
    rows = packed[:, 0, :]                                       # (T, LANES)
    logits = rows[:, OUT_LOGITS:OUT_LOGITS + V]                  # (T, V)
    h_fin = rows[T - 1, OUT_H:OUT_H + O].reshape(1, 1, O)
    c_fin = rows[T - 1, OUT_C:OUT_C + O].reshape(1, 1, O)
    attw = rows[0:1, OUT_ATTW:OUT_ATTW + S]                      # (1, S)
    return logits, (h_fin, c_fin), attw


def attention_decoder_forward(wslab, decoder_hidden, encoder_outputs, input_vec):
    """Single-step forward matching AttentionDecoder.forward (T = 1)."""
    logits, hidden, attw = attention_decoder_decode(
        wslab, decoder_hidden, encoder_outputs, input_vec.reshape(1, V))
    return logits, hidden, attw


# ---- pure-JAX references ----------------------------------------------------
def reference_forward(params, decoder_hidden, encoder_outputs, input_vec):
    S_, _, H_ = encoder_outputs.shape
    h0 = decoder_hidden[0][0]   # (1, O)
    c0 = decoder_hidden[1][0]   # (1, O)

    weights = []
    for i in range(S_):
        cat = jnp.concatenate([h0, encoder_outputs[i]], axis=1)        # (1, O+H)
        weights.append(cat @ params["attn_w"].T + params["attn_b"])    # (1, 1)
    scores = jnp.concatenate(weights, axis=1)                          # (1, S)
    normalized = jax.nn.softmax(scores, axis=1)
    attn_applied = normalized @ encoder_outputs.reshape(S_, H_)        # (1, H)

    x = jnp.concatenate([attn_applied, input_vec[0]], axis=1)          # (1, H+V)
    gates = (x @ params["w_ih"].T + params["b_ih"]
             + h0 @ params["w_hh"].T + params["b_hh"])
    i_g = jax.nn.sigmoid(gates[:, 0:O])
    f_g = jax.nn.sigmoid(gates[:, O:2 * O])
    g_g = jnp.tanh(gates[:, 2 * O:3 * O])
    o_g = jax.nn.sigmoid(gates[:, 3 * O:4 * O])
    c_new = f_g * c0 + i_g * g_g
    h_new = o_g * jnp.tanh(c_new)
    out = h_new @ params["final_w"].T + params["final_b"]
    return out, (h_new[None], c_new[None]), normalized


def reference_decode(params, decoder_hidden, encoder_outputs, inputs):
    hidden = decoder_hidden
    outs, attw = [], None
    for t in range(inputs.shape[0]):
        out, hidden, attw = reference_forward(
            params, hidden, encoder_outputs, inputs[t].reshape(1, 1, V))
        outs.append(out)
    return jnp.concatenate(outs, axis=0), hidden, attw


def make_params(key, hidden_size, output_size, vocab_size):
    ks = jax.random.split(key, 8)
    scale = 0.1
    return {
        "attn_w": scale * jax.random.normal(ks[0], (1, hidden_size + output_size), jnp.float32),
        "attn_b": scale * jax.random.normal(ks[1], (1,), jnp.float32),
        "w_ih": scale * jax.random.normal(ks[2], (4 * output_size, hidden_size + vocab_size), jnp.float32),
        "w_hh": scale * jax.random.normal(ks[3], (4 * output_size, output_size), jnp.float32),
        "b_ih": scale * jax.random.normal(ks[4], (4 * output_size,), jnp.float32),
        "b_hh": scale * jax.random.normal(ks[5], (4 * output_size,), jnp.float32),
        "final_w": scale * jax.random.normal(ks[6], (vocab_size, output_size), jnp.float32),
        "final_b": scale * jax.random.normal(ks[7], (vocab_size,), jnp.float32),
    }


if __name__ == "__main__":
    key = jax.random.PRNGKey(0)
    k_par, k_h, k_c, k_enc, k_in = jax.random.split(key, 5)

    params = make_params(k_par, HIDDEN, OUTPUT, VOCAB)
    wslab = pack_weights(params)         # packed ONCE, reused for every call

    decoder_hidden = (
        0.5 * jax.random.normal(k_h, (1, 1, OUTPUT), jnp.float32),
        0.5 * jax.random.normal(k_c, (1, 1, OUTPUT), jnp.float32),
    )
    encoder_outputs = jax.random.normal(k_enc, (SEQ, 1, HIDDEN), jnp.float32)

    T = 4
    inputs = jax.random.normal(k_in, (T, VOCAB), jnp.float32)

    # ---- single-step forward (matches the PyTorch module interface) --------
    fwd = jax.jit(attention_decoder_forward)
    input_vec = inputs[0].reshape(1, 1, VOCAB)
    out, hidden, attn = fwd(wslab, decoder_hidden, encoder_outputs, input_vec)
    jax.block_until_ready((out, hidden, attn))

    ref_out, ref_hidden, ref_attn = reference_forward(
        params, decoder_hidden, encoder_outputs, input_vec)
    assert out.shape == (1, VOCAB)
    assert hidden[0].shape == (1, 1, OUTPUT) and hidden[1].shape == (1, 1, OUTPUT)
    assert attn.shape == (1, SEQ)
    assert jnp.allclose(out, ref_out, atol=3e-5, rtol=3e-5)
    assert jnp.allclose(hidden[0], ref_hidden[0], atol=3e-5, rtol=3e-5)
    assert jnp.allclose(hidden[1], ref_hidden[1], atol=3e-5, rtol=3e-5)
    assert jnp.allclose(attn, ref_attn, atol=3e-5, rtol=3e-5)

    # ---- hoisted T-step decode: one pallas_call for all T steps ------------
    dec = jax.jit(attention_decoder_decode)
    logits_T, hidden_T, attn_T = dec(wslab, decoder_hidden, encoder_outputs, inputs)
    jax.block_until_ready((logits_T, hidden_T, attn_T))

    ref_logits, ref_hid_T, ref_attn_T = reference_decode(
        params, decoder_hidden, encoder_outputs, inputs)
    assert logits_T.shape == (T, VOCAB)
    assert jnp.allclose(logits_T, ref_logits, atol=3e-5, rtol=3e-5)
    assert jnp.allclose(hidden_T[0], ref_hid_T[0], atol=3e-5, rtol=3e-5)
    assert jnp.allclose(hidden_T[1], ref_hid_T[1], atol=3e-5, rtol=3e-5)
    assert jnp.allclose(attn_T, ref_attn_T, atol=3e-5, rtol=3e-5)

    print("KERNEL_OK")
</pallas_src>

<mosaic_0001>
module attributes {stable_mosaic.version = 11 : i64} {
  func.func @_attn_decoder_kernel(%arg0: i32, %arg1: memref<136x128xf32, #tpu.memory_space<vmem>>, %arg2: memref<1x64xf32, #tpu.memory_space<vmem>>, %arg3: memref<8x32xf32, #tpu.memory_space<vmem>>, %arg4: memref<1x1x128xf32, #tpu.memory_space<vmem>>, %arg5: memref<1x1x128xf32, #tpu.memory_space<vmem>>, %arg6: memref<1x128xf32, #tpu.memory_space<vmem>>, %arg7: memref<1x128xf32, #tpu.memory_space<vmem>>) attributes {dimension_semantics = [#tpu.dimension_semantics<arbitrary>], iteration_bounds = array<i64: 1>, scalar_prefetch = 0 : i64, scratch_operands = 2 : i64, tpu.core_type = #tpu.core_type<tc>, window_params = [{pipeline_mode = #tpu.pipeline_mode<synchronous>, transform_indices = @transform_0, window_bounds = array<i64: 136, 128>}, {pipeline_mode = #tpu.pipeline_mode<synchronous>, transform_indices = @transform_1, window_bounds = array<i64: 1, 64>}, {pipeline_mode = #tpu.pipeline_mode<synchronous>, transform_indices = @transform_2, window_bounds = array<i64: 8, 32>}, {transform_indices = @transform_3, window_bounds = array<i64: 1, 1, 128>}, {transform_indices = @transform_4, window_bounds = array<i64: 1, 1, 128>}]} {
    %c96 = arith.constant 96 : index
    %c0 = arith.constant 0 : index
    %0 = vector.load %arg1[%c96, %c0] : memref<136x128xf32, #tpu.memory_space<vmem>>, vector<8x128xf32>
    %c0_i32 = arith.constant 0 : i32
    %1 = arith.cmpi eq, %arg0, %c0_i32 : i32
    %2 = arith.extui %1 : i1 to i32
    %c0_i32_0 = arith.constant 0 : i32
    %3 = arith.cmpi ne, %2, %c0_i32_0 : i32
    scf.if %3 {
      %c0_21 = arith.constant 0 : index
      %c0_22 = arith.constant 0 : index
      %48 = vector.load %arg2[%c0_21, %c0_22] : memref<1x64xf32, #tpu.memory_space<vmem>>, vector<1x64xf32>
      %cst_23 = arith.constant 0.000000e+00 : f32
      %49 = vector.broadcast %cst_23 : f32 to vector<1x64xf32>
      %50 = tpu.concatenate %48, %49 in 1 : vector<1x64xf32>, vector<1x64xf32> -> vector<1x128xf32>
      %c0_24 = arith.constant 0 : index
      %c0_25 = arith.constant 0 : index
      %51 = vector.load %arg6[%c0_24, %c0_25] : memref<1x128xf32, #tpu.memory_space<vmem>>, vector<1x128xf32>
      tpu.vector_store %arg6[%c0_24, %c0_25], %50 {strides = array<i32>} : memref<1x128xf32, #tpu.memory_space<vmem>>, vector<1x128xf32>,
      %c0_26 = arith.constant 0 : index
      %c0_27 = arith.constant 0 : index
      %52 = vector.load %arg3[%c0_26, %c0_27] : memref<8x32xf32, #tpu.memory_space<vmem>>, vector<8x32xf32>
      %53 = vector.extract_strided_slice %0 {offsets = [2, 0], sizes = [1, 32], strides = [1, 1]} : vector<8x128xf32> to vector<1x32xf32>
      %54 = vector.broadcast %53 : vector<1x32xf32> to vector<8x32xf32>
      %55 = arith.mulf %52, %54 : vector<8x32xf32>
      %cst_28 = arith.constant dense<0.000000e+00> : vector<8xf32>
      %56 = vector.multi_reduction <add>, %55, %cst_28 [1] : vector<8x32xf32> to vector<8xf32>
      %57 = vector.shape_cast %56 : vector<8xf32> to vector<8x1xf32>
      %cst_29 = arith.constant dense<0xFF800000> : vector<1xf32>
      %58 = vector.multi_reduction <maximumf>, %57, %cst_29 [0] : vector<8x1xf32> to vector<1xf32>
      %59 = vector.shape_cast %58 : vector<1xf32> to vector<1x1xf32>
      %60 = vector.broadcast %59 : vector<1x1xf32> to vector<8x1xf32>
      %61 = arith.subf %57, %60 : vector<8x1xf32>
      %62 = math.exp %61 : vector<8x1xf32>
      %cst_30 = arith.constant dense<0.000000e+00> : vector<1xf32>
      %63 = vector.multi_reduction <add>, %62, %cst_30 [0] : vector<8x1xf32> to vector<1xf32>
      %64 = vector.shape_cast %63 : vector<1xf32> to vector<1x1xf32>
      %65 = vector.broadcast %64 : vector<1x1xf32> to vector<8x1xf32>
      %66 = arith.divf %62, %65 : vector<8x1xf32>
      %67 = vector.broadcast %66 : vector<8x1xf32> to vector<8x32xf32>
      %68 = arith.mulf %67, %52 : vector<8x32xf32>
      %cst_31 = arith.constant dense<0.000000e+00> : vector<32xf32>
      %69 = vector.multi_reduction <add>, %68, %cst_31 [0] : vector<8x32xf32> to vector<32xf32>
      %70 = vector.shape_cast %69 : vector<32xf32> to vector<1x32xf32>
      %71 = tpu.iota {dimensions = array<i32: 0>} : vector<8x128xi32>
      %72 = tpu.iota {dimensions = array<i32: 1>} : vector<8x128xi32>
      %c32_i32 = arith.constant 32 : i32
      %73 = vector.broadcast %c32_i32 : i32 to vector<8x128xi32>
      %74 = arith.addi %71, %73 : vector<8x128xi32>
      %75 = arith.cmpi eq, %72, %74 : vector<8x128xi32>
      %cst_32 = arith.constant 0.000000e+00 : f32
      %76 = vector.shape_cast %66 : vector<8x1xf32> to vector<8x1xf32>
      %77 = vector.broadcast %76 : vector<8x1xf32> to vector<8x128xf32>
      %78 = vector.broadcast %cst_32 : f32 to vector<8x128xf32>
      %79 = arith.select %75, %77, %78 : vector<8x128xi1>, vector<8x128xf32>
      %cst_33 = arith.constant dense<0.000000e+00> : vector<128xf32>
      %80 = vector.multi_reduction <add>, %79, %cst_33 [0] : vector<8x128xf32> to vector<128xf32>
      %81 = vector.shape_cast %80 : vector<128xf32> to vector<1x128xf32>
      %cst_34 = arith.constant 0.000000e+00 : f32
      %82 = vector.broadcast %cst_34 : f32 to vector<1x96xf32>
      %83 = tpu.concatenate %70, %82 in 1 : vector<1x32xf32>, vector<1x96xf32> -> vector<1x128xf32>
      %84 = arith.addf %83, %81 : vector<1x128xf32>
      %c0_35 = arith.constant 0 : index
      %c0_36 = arith.constant 0 : index
      %85 = vector.load %arg7[%c0_35, %c0_36] : memref<1x128xf32, #tpu.memory_space<vmem>>, vector<1x128xf32>
      tpu.vector_store %arg7[%c0_35, %c0_36], %84 {strides = array<i32>} : memref<1x128xf32, #tpu.memory_space<vmem>>, vector<1x128xf32>,
    } else {
    }
    %c0_1 = arith.constant 0 : index
    %c0_2 = arith.constant 0 : index
    %4 = vector.load %arg7[%c0_1, %c0_2] : memref<1x128xf32, #tpu.memory_space<vmem>>, vector<1x128xf32>
    %5 = vector.extract_strided_slice %4 {offsets = [0, 0], sizes = [1, 32], strides = [1, 1]} : vector<1x128xf32> to vector<1x32xf32>
    %6 = vector.extract_strided_slice %4 {offsets = [0, 32], sizes = [1, 32], strides = [1, 1]} : vector<1x128xf32> to vector<1x32xf32>
    %c0_3 = arith.constant 0 : index
    %c0_4 = arith.constant 0 : index
    %7 = vector.load %arg6[%c0_3, %c0_4] : memref<1x128xf32, #tpu.memory_space<vmem>>, vector<1x128xf32>
    %8 = vector.extract_strided_slice %7 {offsets = [0, 0], sizes = [1, 32], strides = [1, 1]} : vector<1x128xf32> to vector<1x32xf32>
    %9 = vector.extract_strided_slice %7 {offsets = [0, 32], sizes = [1, 32], strides = [1, 1]} : vector<1x128xf32> to vector<1x32xf32>
    %c0_5 = arith.constant 0 : index
    %c0_6 = arith.constant 0 : index
    %c0_7 = arith.constant 0 : index
    %10 = vector.load %arg4[%c0_5, %c0_6, %c0_7] : memref<1x1x128xf32, #tpu.memory_space<vmem>>, vector<1x1x128xf32>
    %11 = vector.shape_cast %10 : vector<1x1x128xf32> to vector<1x128xf32>
    %12 = vector.extract_strided_slice %11 {offsets = [0, 0], sizes = [1, 32], strides = [1, 1]} : vector<1x128xf32> to vector<1x32xf32>
    %13 = vector.extract_strided_slice %0 {offsets = [0, 0], sizes = [1, 128], strides = [1, 1]} : vector<8x128xf32> to vector<1x128xf32>
    %14 = vector.extract_strided_slice %0 {offsets = [1, 0], sizes = [1, 32], strides = [1, 1]} : vector<8x128xf32> to vector<1x32xf32>
    %c104 = arith.constant 104 : index
    %c0_8 = arith.constant 0 : index
    %15 = vector.load %arg1[%c104, %c0_8] : memref<136x128xf32, #tpu.memory_space<vmem>>, vector<32x128xf32>
    %16 = vector.extract_strided_slice %15 {offsets = [0, 0], sizes = [32, 32], strides = [1, 1]} : vector<32x128xf32> to vector<32x32xf32>
    %17 = tpu.concatenate %8, %12 in 1 : vector<1x32xf32>, vector<1x32xf32> -> vector<1x64xf32>
    %c0_9 = arith.constant 0 : index
    %c0_10 = arith.constant 0 : index
    %18 = vector.load %arg1[%c0_9, %c0_10] : memref<136x128xf32, #tpu.memory_space<vmem>>, vector<64x128xf32>
    %cst = arith.constant dense<0.000000e+00> : vector<1x128xf32>
    %19 = tpu.matmul %17, %18, %cst {dimension_numbers = #tpu.dot_dimension_numbers<[1], [0], [0], [1], [0, 0, 1, 1], [], []>} : vector<1x64xf32>, vector<64x128xf32>, vector<1x128xf32> -> vector<1x128xf32>
    %c64 = arith.constant 64 : index
    %c0_11 = arith.constant 0 : index
    %20 = vector.load %arg1[%c64, %c0_11] : memref<136x128xf32, #tpu.memory_space<vmem>>, vector<32x128xf32>
    %cst_12 = arith.constant dense<0.000000e+00> : vector<1x128xf32>
    %21 = tpu.matmul %5, %20, %cst_12 {dimension_numbers = #tpu.dot_dimension_numbers<[1], [0], [0], [1], [0, 0, 1, 1], [], []>} : vector<1x32xf32>, vector<32x128xf32>, vector<1x128xf32> -> vector<1x128xf32>
    %22 = arith.addf %19, %21 : vector<1x128xf32>
    %23 = arith.addf %22, %13 : vector<1x128xf32>
    %24 = arith.negf %23 : vector<1x128xf32>
    %25 = math.exp %24 : vector<1x128xf32>
    %cst_13 = arith.constant 1.000000e+00 : f32
    %26 = vector.broadcast %cst_13 : f32 to vector<1x128xf32>
    %27 = arith.addf %26, %25 : vector<1x128xf32>
    %28 = arith.divf %26, %27 : vector<1x128xf32>
    %29 = vector.extract_strided_slice %28 {offsets = [0, 0], sizes = [1, 32], strides = [1, 1]} : vector<1x128xf32> to vector<1x32xf32>
    %30 = vector.extract_strided_slice %28 {offsets = [0, 32], sizes = [1, 32], strides = [1, 1]} : vector<1x128xf32> to vector<1x32xf32>
    %31 = vector.extract_strided_slice %28 {offsets = [0, 96], sizes = [1, 32], strides = [1, 1]} : vector<1x128xf32> to vector<1x32xf32>
    %32 = vector.extract_strided_slice %23 {offsets = [0, 64], sizes = [1, 32], strides = [1, 1]} : vector<1x128xf32> to vector<1x32xf32>
    %33 = math.tanh %32 : vector<1x32xf32>
    %34 = arith.mulf %30, %9 : vector<1x32xf32>
    %35 = arith.mulf %29, %33 : vector<1x32xf32>
    %36 = arith.addf %34, %35 : vector<1x32xf32>
    %37 = math.tanh %36 : vector<1x32xf32>
    %38 = arith.mulf %31, %37 : vector<1x32xf32>
    %cst_14 = arith.constant dense<0.000000e+00> : vector<1x32xf32>
    %39 = tpu.matmul %38, %16, %cst_14 {dimension_numbers = #tpu.dot_dimension_numbers<[1], [0], [0], [1], [0, 0, 1, 1], [], []>} : vector<1x32xf32>, vector<32x32xf32>, vector<1x32xf32> -> vector<1x32xf32>
    %40 = arith.addf %39, %14 : vector<1x32xf32>
    %cst_15 = arith.constant 0.000000e+00 : f32
    %41 = vector.broadcast %cst_15 : f32 to vector<1x64xf32>
    %42 = tpu.concatenate %38, %36, %41 in 1 : vector<1x32xf32>, vector<1x32xf32>, vector<1x64xf32> -> vector<1x128xf32>
    %c0_16 = arith.constant 0 : index
    %c0_17 = arith.constant 0 : index
    %43 = vector.load %arg6[%c0_16, %c0_17] : memref<1x128xf32, #tpu.memory_space<vmem>>, vector<1x128xf32>
    tpu.vector_store %arg6[%c0_16, %c0_17], %42 {strides = array<i32>} : memref<1x128xf32, #tpu.memory_space<vmem>>, vector<1x128xf32>,
    %44 = tpu.concatenate %40, %38, %36, %6 in 1 : vector<1x32xf32>, vector<1x32xf32>, vector<1x32xf32>, vector<1x32xf32> -> vector<1x128xf32>
    %c0_18 = arith.constant 0 : index
    %c0_19 = arith.constant 0 : index
    %c0_20 = arith.constant 0 : index
    %45 = vector.load %arg5[%c0_18, %c0_19, %c0_20] : memref<1x1x128xf32, #tpu.memory_space<vmem>>, vector<1x1x128xf32>
    %46 = vector.shape_cast %45 : vector<1x1x128xf32> to vector<1x128xf32>
    %47 = vector.shape_cast %44 : vector<1x128xf32> to vector<1x1x128xf32>
    tpu.vector_store %arg5[%c0_18, %c0_19, %c0_20], %47 {strides = array<i32>} : memref<1x1x128xf32, #tpu.memory_space<vmem>>, vector<1x1x128xf32>,
    return
  }
  func.func @transform_0(%arg0: i32) -> (i32, i32) {
    %c0_i32 = arith.constant 0 : i32
    %c0_i32_0 = arith.constant 0 : i32
    %c0_i32_1 = arith.constant 0 : i32
    return %c0_i32, %c0_i32_0 : i32, i32
  }
  func.func @transform_1(%arg0: i32) -> (i32, i32) {
    %c0_i32 = arith.constant 0 : i32
    %c0_i32_0 = arith.constant 0 : i32
    %c0_i32_1 = arith.constant 0 : i32
    return %c0_i32, %c0_i32_0 : i32, i32
  }
  func.func @transform_2(%arg0: i32) -> (i32, i32) {
    %c0_i32 = arith.constant 0 : i32
    %c0_i32_0 = arith.constant 0 : i32
    %c0_i32_1 = arith.constant 0 : i32
    return %c0_i32, %c0_i32_0 : i32, i32
  }
  func.func @transform_3(%arg0: i32) -> (i32, i32, i32) {
    %c0_i32 = arith.constant 0 : i32
    %c0_i32_0 = arith.constant 0 : i32
    %c0_i32_1 = arith.constant 0 : i32
    return %arg0, %c0_i32, %c0_i32_0 : i32, i32, i32
  }
  func.func @transform_4(%arg0: i32) -> (i32, i32, i32) {
    %c0_i32 = arith.constant 0 : i32
    %c0_i32_0 = arith.constant 0 : i32
    %c0_i32_1 = arith.constant 0 : i32
    return %arg0, %c0_i32, %c0_i32_0 : i32, i32, i32
  }
}

</mosaic_0001>

<llo_original>
// kernel: attention_decoder_forward.1
$region0: #{attention_decoder_forward.1}
  #allocation0 [shape = 'u32[]', space=smem, size = 0x4, offset = 0x4, fixed_abs, tag = 'smem constant byte address 0x4 - core index']
  #allocation1 [shape = 'u32[144,128]{1,0:T(1,128)}', space=vmem, size = 0x12000, scoped, tag = 'internal scratch']
  #allocation2 [shape = 'f32[1,128]{1,0:T(1,128)}', space=vmem, size = 0x200, scoped, tag = 'scratch operand']
  #allocation3 [shape = 'f32[1,128]{1,0:T(1,128)}', space=vmem, size = 0x200, scoped, tag = 'scratch operand']
  %s0 = inlined_call_operand.hbm [shape: f32[136,128], index: 0, kind: input, shape index: {}]
  %s1 = inlined_call_operand.vmem [shape: f32[1,64], index: 1, kind: input, shape index: {}]
  %s2 = inlined_call_operand.vmem [shape: f32[8,32], index: 2, kind: input, shape index: {}]
  %s3 = inlined_call_operand.vmem [shape: f32[1,1,128], index: 3, kind: input, shape index: {}]
  %s4 = inlined_call_operand.vmem [shape: f32[1,1,128], index: 4, kind: output, shape index: {}]
  %s5 = sld [smem:[#allocation0]]
  $region34: #{attention_decoder_forward.1} parent=0
    _
  %s7 = ssub.s32 1, %s5
  %s8 = scalar_select 0, %s7, %s5
  $region1: #{attention_decoder_forward.1} parent=0
    #allocation4 [shape = 'u8[69632]{0}', space=vmem, size = 0x11000, scoped, tag = 'input window, operand 0, single buffered']
    #allocation5 [shape = 's32[1]{0}', space=sflag, size = 0x4, scoped, tag = 'scoped memory for attention_decoder_forward.1']
    %9 = vsyncpa [#allocation5], 0
    // Predicated region
    $region2: #{attention_decoder_forward.1} parent=1 // pred_check
      _
    $region3: #{attention_decoder_forward.1} parent=1 // pred_check_branch
      %11 = sbr.rel (0) target = $region5
    $region4: #{attention_decoder_forward.1} parent=1 // pred_region
      %s13 = ssub.s32 2176, 2176
      %14 = vsyncadd [#allocation5], %s13
      %s15 = sshll.u32 [#allocation4], 4
      %s16 = int_to_ptr.vmem [resolvable:$true] %s15
      %21 = dma.hbm_to_vmem [thread:$0]  %s0, 2176, %s16, [#allocation5], 128, 128, 8
    $region5: #{attention_decoder_forward.1} parent=1 // pred_fallthru
      _
    // Predicated region
    $region6: #{attention_decoder_forward.1} parent=1 // pred_check
      _
    $region7: #{attention_decoder_forward.1} parent=1 // pred_check_branch
      %23 = sbr.rel (0) target = $region9
    $region8: #{attention_decoder_forward.1} parent=1 // pred_region
      _
    $region9: #{attention_decoder_forward.1} parent=1 // pred_fallthru
      _
    // Predicated region
    $region10: #{attention_decoder_forward.1} parent=1 // pred_check
      _
    $region11: #{attention_decoder_forward.1} parent=1 // pred_check_branch
      %25 = sbr.rel (0) target = $region13
    $region12: #{attention_decoder_forward.1} parent=1 // pred_region
      _
    $region13: #{attention_decoder_forward.1} parent=1 // pred_fallthru
      _
    // Predicated region
    $region14: #{attention_decoder_forward.1} parent=1 // pred_check
      _
    $region15: #{attention_decoder_forward.1} parent=1 // pred_check_branch
      %27 = sbr.rel (0) target = $region17
    $region16: #{attention_decoder_forward.1} parent=1 // pred_region
      _
    $region17: #{attention_decoder_forward.1} parent=1 // pred_fallthru
      _
    // Predicated region
    $region18: #{attention_decoder_forward.1} parent=1 // pred_check
      _
    $region19: #{attention_decoder_forward.1} parent=1 // pred_check_branch
      %29 = sbr.rel (0) target = $region21
    $region20: #{attention_decoder_forward.1} parent=1 // pred_region
      %30 = dma.done [#allocation5], 2176
    $region21: #{attention_decoder_forward.1} parent=1 // pred_fallthru
      _
    %v31 = vld [vmem:[#allocation4 + $0x60] sm:$0xff]
    %p32 = scmp.eq.s32.totalorder 0, 0
    // Predicated region
    $region22: #{attention_decoder_forward.1} parent=1 // pred_check
      %p33 = pneg %p32
    $region23: #{attention_decoder_forward.1} parent=1 // pred_check_branch
      %35 = sbr.rel (%p33) target = $region25
    $region24: #{attention_decoder_forward.1} parent=1 // pred_region
      %v36 = vld [vmem:[%s1] sm:$0x1]
      %vm37 = vcmask 523264
      %v38 = vsel %vm37, %v36, 0.0
      %39 = vst [vmem:[#allocation2] sm:$0x1] %v38
      %v40 = vld [vmem:[%s2] sm:$0xff]
      %v41 = vlaneseq
      %v42 = vshrl.u32 %v41, 7
      %v43 = vsub.s32 2, %v42
      %v44 = vrot.slane %v31, %v43
      %v45 = vmul.f32 %v40, %v44
      %vm46 = vcmask 261120
      %v47 = vsel %vm46, %v45, 0.0
      %48 = vadd.xlane.f32.xlu0 %v47
      %v49 = vpop.xlane.xlu0 %48
      %v50 = vrot.slane %v49, 4
      %v51 = vmax.f32 %v49, %v50
      %v52 = vrot.slane %v51, 2
      %v53 = vmax.f32 %v51, %v52
      %v54 = vrot.slane %v53, 1
      %v55 = vmax.f32 %v53, %v54
      %v56 = vsub.f32 %v49, %v55
      %v57 = vmul.f32 %v56, 1.442695
      %v58 = vpow.pop %v57
      %v59 = vrot.slane %v58, 4
      %v60 = vadd.f32 %v58, %v59
      %v61 = vrot.slane %v60, 2
      %v62 = vadd.f32 %v60, %v61
      %v63 = vrot.slane %v62, 1
      %v64 = vadd.f32 %v62, %v63
      %v65 = vrcp.pop %v64
      %v66 = vmul.f32 %v58, %v65
      %v67 = vmul.f32 %v66, %v40
      %v68 = vsel %vm46, %v67, 0.0
      %v69 = vrot.slane %v68, 4
      %v70 = vadd.f32 %v68, %v69
      %v71 = vrot.slane %v70, 2
      %v72 = vadd.f32 %v70, %v71
      %v73 = vrot.slane %v72, 1
      %v74 = vadd.f32 %v72, %v73
      %v75 = vlaneseq
      %v76 = vshrl.u32 %v75, 7
      %v77 = vlaneseq
      %v78 = vand.u32 %v77, 127
      %v79 = vadd.s32 %v76, 32
      %vm80 = vcmp.eq.s32.totalorder %v78, %v79
      %v81 = vsel %vm80, %v66, 0.0
      %v82 = vrot.slane %v81, 4
      %v83 = vadd.f32 %v81, %v82
      %v84 = vrot.slane %v83, 2
      %v85 = vadd.f32 %v83, %v84
      %v86 = vrot.slane %v85, 1
      %v87 = vadd.f32 %v85, %v86
      %v88 = vsel %vm46, %v74, 0.0
      %v89 = vadd.f32 %v88, %v87
      %90 = vst [vmem:[#allocation3] sm:$0x1] %v89
    $region25: #{attention_decoder_forward.1} parent=1 // pred_fallthru
      _
    %v91 = vld [vmem:[#allocation3] sm:$0x1]
    %v92 = vld [vmem:[#allocation2] sm:$0x1]
    %v93 = vld [vmem:[%s3] sm:$0x1]
    %v94 = vld [vmem:[#allocation4 + $0x68] sm:$0xff]
    %v95 = vld [vmem:[#allocation4 + $0x70] sm:$0xff]
    %v96 = vld [vmem:[#allocation4 + $0x78] sm:$0xff]
    %v97 = vld [vmem:[#allocation4 + $0x80] sm:$0xff]
    %v99 = vlaneseq
    %v100 = vshrl.u32 %v99, 7
    %v101 = vsub.s32 0, %v100
    %v102 = vrot.slane %v93, %v101
    %103 = vrot.lane.b32.xlu0 %v102, 32
    %v104 = vpop.permute.xlu0 %103
    %vm106 = vcmask 261120
    %v107 = vsel %vm106, %v92, %v104
    %v108 = vld [vmem:[#allocation4] sm:$0xff]
    %v109 = vld [vmem:[#allocation4 + $0x8] sm:$0xff]
    %v110 = vld [vmem:[#allocation4 + $0x10] sm:$0xff]
    %v111 = vld [vmem:[#allocation4 + $0x18] sm:$0xff]
    %v112 = vld [vmem:[#allocation4 + $0x20] sm:$0xff]
    %v113 = vld [vmem:[#allocation4 + $0x28] sm:$0xff]
    %v114 = vld [vmem:[#allocation4 + $0x30] sm:$0xff]
    %v115 = vld [vmem:[#allocation4 + $0x38] sm:$0xff]
    %v116 = vld [vmem:[#allocation4 + $0x40] sm:$0xff]
    %v117 = vld [vmem:[#allocation4 + $0x48] sm:$0xff]
    %v118 = vld [vmem:[#allocation4 + $0x50] sm:$0xff]
    %v119 = vld [vmem:[#allocation4 + $0x58] sm:$0xff]
    %v121 = vsel %vm106, %v91, 0
    %123 = vmatprep.subr.mxu0 0.0
    %124 = vmatpush1.msra.mxu0 0.0
    %125 = vmatprep.subr.mxu0 0.0
    %126 = vmatpush1.msra.mxu0 0.0
    %127 = vmatprep.subr.mxu0 0.0
    %128 = vmatpush1.msra.mxu0 0.0
    %129 = vmatprep.subr.mxu0 0.0
    %130 = vmatpush1.msra.mxu0 0.0
    %131 = vmatprep.subr.mxu0 0.0
    %132 = vmatpush1.msra.mxu0 0.0
    %133 = vmatprep.subr.mxu0 0.0
    %134 = vmatpush1.msra.mxu0 0.0
    %135 = vmatprep.subr.mxu0 0.0
    %136 = vmatpush1.msra.mxu0 0.0
    %137 = vmatprep.subr.mxu0 0.0
    %138 = vmatpush1.msra.mxu0 0.0
    %139 = vmatprep.subr.mxu0 0.0
    %140 = vmatpush1.msra.mxu0 0.0
    %141 = vmatprep.subr.mxu0 0.0
    %142 = vmatpush1.msra.mxu0 0.0
    %143 = vmatprep.subr.mxu0 0.0
    %144 = vmatpush1.msra.mxu0 0.0
    %145 = vmatprep.subr.mxu0 0.0
    %146 = vmatpush1.msra.mxu0 0.0
    %147 = vmatprep.subr.mxu0 0.0
    %148 = vmatpush1.msra.mxu0 %v119
    %149 = vmatprep.subr.mxu0 0.0
    %150 = vmatpush1.msra.mxu0 %v118
    %151 = vmatprep.subr.mxu0 0.0
    %152 = vmatpush1.msra.mxu0 %v117
    %153 = vmatprep.subr.mxu0 0.0
    %154 = vmatpush1.msra.mxu0 %v116
    %155 = vmatprep.subr.mxu0 0.0
    %156 = vmatpush2.msra.mxu0 0.0
    %157 = vmatprep.subr.mxu0 0.0
    %158 = vmatpush2.msra.mxu0 0.0
    %159 = vmatprep.subr.mxu0 0.0
    %160 = vmatpush2.msra.mxu0 0.0
    %161 = vmatprep.subr.mxu0 0.0
    %162 = vmatpush2.msra.mxu0 0.0
    %163 = vmatprep.subr.mxu0 0.0
    %164 = vmatpush2.msra.mxu0 0.0
    %165 = vmatprep.subr.mxu0 0.0
    %166 = vmatpush2.msra.mxu0 0.0
    %167 = vmatprep.subr.mxu0 0.0
    %168 = vmatpush2.msra.mxu0 0.0
    %169 = vmatprep.subr.mxu0 0.0
    %170 = vmatpush2.msra.mxu0 0.0
    %171 = vmatprep.subr.mxu0 0.0
    %172 = vmatpush2.msra.mxu0 0.0
    %173 = vmatprep.subr.mxu0 0.0
    %174 = vmatpush2.msra.mxu0 0.0
    %175 = vmatprep.subr.mxu0 0.0
    %176 = vmatpush2.msra.mxu0 0.0
    %177 = vmatprep.subr.mxu0 0.0
    %178 = vmatpush2.msra.mxu0 0.0
    %179 = vmatprep.subr.mxu0 0.0
    %180 = vmatpush2.msra.mxu0 0.0
    %181 = vmatprep.subr.mxu0 0.0
    %182 = vmatpush2.msra.mxu0 0.0
    %183 = vmatprep.subr.mxu0 0.0
    %184 = vmatpush2.msra.mxu0 0.0
    %185 = vmatprep.subr.mxu0 0.0
    %186 = vmatpush2.msra.mxu0 0.0
    %187 = vmatprep.mubr.f32.mxu0 0.0
    %188 = vmatmul.mubr.f32.gmra.mxu0 %v121
    %v189 = vpop.f32.mrf.mxu0
    %v190 = vadd.f32 0.0, %v189
    %v191 = vpop.f32.mrf.mxu0
    %192 = vdwg.mxu0
    %vm193 = vcmask 523264
    %v195 = vsel %vm193, %v107, 0
    %197 = vmatprep.subr.mxu0 0.0
    %198 = vmatpush1.msra.mxu0 0.0
    %199 = vmatprep.subr.mxu0 0.0
    %200 = vmatpush1.msra.mxu0 0.0
    %201 = vmatprep.subr.mxu0 0.0
    %202 = vmatpush1.msra.mxu0 0.0
    %203 = vmatprep.subr.mxu0 0.0
    %204 = vmatpush1.msra.mxu0 0.0
    %205 = vmatprep.subr.mxu0 0.0
    %206 = vmatpush1.msra.mxu0 0.0
    %207 = vmatprep.subr.mxu0 0.0
    %208 = vmatpush1.msra.mxu0 0.0
    %209 = vmatprep.subr.mxu0 0.0
    %210 = vmatpush1.msra.mxu0 0.0
    %211 = vmatprep.subr.mxu0 0.0
    %212 = vmatpush1.msra.mxu0 0.0
    %213 = vmatprep.subr.mxu0 0.0
    %214 = vmatpush1.msra.mxu0 %v115
    %215 = vmatprep.subr.mxu0 0.0
    %216 = vmatpush1.msra.mxu0 %v114
    %217 = vmatprep.subr.mxu0 0.0
    %218 = vmatpush1.msra.mxu0 %v113
    %219 = vmatprep.subr.mxu0 0.0
    %220 = vmatpush1.msra.mxu0 %v112
    %221 = vmatprep.subr.mxu0 0.0
    %222 = vmatpush1.msra.mxu0 %v111
    %223 = vmatprep.subr.mxu0 0.0
    %224 = vmatpush1.msra.mxu0 %v110
    %225 = vmatprep.subr.mxu0 0.0
    %226 = vmatpush1.msra.mxu0 %v109
    %227 = vmatprep.subr.mxu0 0.0
    %228 = vmatpush1.msra.mxu0 %v108
    %229 = vmatprep.subr.mxu0 0.0
    %230 = vmatpush2.msra.mxu0 0.0
    %231 = vmatprep.subr.mxu0 0.0
    %232 = vmatpush2.msra.mxu0 0.0
    %233 = vmatprep.subr.mxu0 0.0
    %234 = vmatpush2.msra.mxu0 0.0
    %235 = vmatprep.subr.mxu0 0.0
    %236 = vmatpush2.msra.mxu0 0.0
    %237 = vmatprep.subr.mxu0 0.0
    %238 = vmatpush2.msra.mxu0 0.0
    %239 = vmatprep.subr.mxu0 0.0
    %240 = vmatpush2.msra.mxu0 0.0
    %241 = vmatprep.subr.mxu0 0.0
    %242 = vmatpush2.msra.mxu0 0.0
    %243 = vmatprep.subr.mxu0 0.0
    %244 = vmatpush2.msra.mxu0 0.0
    %245 = vmatprep.subr.mxu0 0.0
    %246 = vmatpush2.msra.mxu0 0.0
    %247 = vmatprep.subr.mxu0 0.0
    %248 = vmatpush2.msra.mxu0 0.0
    %249 = vmatprep.subr.mxu0 0.0
    %250 = vmatpush2.msra.mxu0 0.0
    %251 = vmatprep.subr.mxu0 0.0
    %252 = vmatpush2.msra.mxu0 0.0
    %253 = vmatprep.subr.mxu0 0.0
    %254 = vmatpush2.msra.mxu0 0.0
    %255 = vmatprep.subr.mxu0 0.0
    %256 = vmatpush2.msra.mxu0 0.0
    %257 = vmatprep.subr.mxu0 0.0
    %258 = vmatpush2.msra.mxu0 0.0
    %259 = vmatprep.subr.mxu0 0.0
    %260 = vmatpush2.msra.mxu0 0.0
    %261 = vmatprep.mubr.f32.mxu0 0.0
    %262 = vmatmul.mubr.f32.gmra.mxu0 %v195
    %v263 = vpop.f32.mrf.mxu0
    %v264 = vadd.f32 %v190, %v263
    %v265 = vpop.f32.mrf.mxu0
    %266 = vdwg.mxu0
    %v267 = vadd.f32 %v264, %v31
    %v268 = vxor.u32 %v267, 2147483648
    %v269 = vmul.f32 %v268, 1.442695
    %v270 = vpow.pop %v269
    %v271 = vadd.f32 %v270, 1.0
    %v272 = vrcp.pop %v271
    %v273 = vmul.f32 1.0, %v272
    %v274 = vtanh.pop %v267
    %v275 = vmul.f32 %v273, %v92
    %277 = vrot.lane.b32.xlu0 %v274, 64
    %v278 = vpop.permute.xlu0 %277
    %v280 = vmul.f32 %v273, %v278
    %282 = vrot.lane.b32.xlu0 %v280, 32
    %v283 = vpop.permute.xlu0 %282
    %v285 = vadd.f32 %v275, %v283
    %v286 = vtanh.pop %v285
    %288 = vrot.lane.b32.xlu0 %v286, 64
    %v289 = vpop.permute.xlu0 %288
    %v291 = vmul.f32 %v273, %v289
    %293 = vrot.lane.b32.xlu0 %v291, 32
    %v294 = vpop.permute.xlu0 %293
    %v296 = vrot.slane %v31, 1
    %v298 = vsel %vm106, %v294, 0
    %300 = vmatprep.subr.mxu0 0.0
    %301 = vmatpush1.msra.mxu0 0.0
    %302 = vmatprep.subr.mxu0 0.0
    %303 = vmatpush1.msra.mxu0 0.0
    %304 = vmatprep.subr.mxu0 0.0
    %305 = vmatpush1.msra.mxu0 0.0
    %306 = vmatprep.subr.mxu0 0.0
    %307 = vmatpush1.msra.mxu0 0.0
    %308 = vmatprep.subr.mxu0 0.0
    %309 = vmatpush1.msra.mxu0 0.0
    %310 = vmatprep.subr.mxu0 0.0
    %311 = vmatpush1.msra.mxu0 0.0
    %312 = vmatprep.subr.mxu0 0.0
    %313 = vmatpush1.msra.mxu0 0.0
    %314 = vmatprep.subr.mxu0 0.0
    %315 = vmatpush1.msra.mxu0 0.0
    %316 = vmatprep.subr.mxu0 0.0
    %317 = vmatpush1.msra.mxu0 0.0
    %318 = vmatprep.subr.mxu0 0.0
    %319 = vmatpush1.msra.mxu0 0.0
    %320 = vmatprep.subr.mxu0 0.0
    %321 = vmatpush1.msra.mxu0 0.0
    %322 = vmatprep.subr.mxu0 0.0
    %323 = vmatpush1.msra.mxu0 0.0
    %324 = vmatprep.subr.mxu0 0.0
    %325 = vmatpush1.msra.mxu0 %v97
    %326 = vmatprep.subr.mxu0 0.0
    %327 = vmatpush1.msra.mxu0 %v96
    %328 = vmatprep.subr.mxu0 0.0
    %329 = vmatpush1.msra.mxu0 %v95
    %330 = vmatprep.subr.mxu0 0.0
    %331 = vmatpush1.msra.mxu0 %v94
    %332 = vmatprep.subr.mxu0 0.0
    %333 = vmatpush2.msra.mxu0 0.0
    %334 = vmatprep.subr.mxu0 0.0
    %335 = vmatpush2.msra.mxu0 0.0
    %336 = vmatprep.subr.mxu0 0.0
    %337 = vmatpush2.msra.mxu0 0.0
    %338 = vmatprep.subr.mxu0 0.0
    %339 = vmatpush2.msra.mxu0 0.0
    %340 = vmatprep.subr.mxu0 0.0
    %341 = vmatpush2.msra.mxu0 0.0
    %342 = vmatprep.subr.mxu0 0.0
    %343 = vmatpush2.msra.mxu0 0.0
    %344 = vmatprep.subr.mxu0 0.0
    %345 = vmatpush2.msra.mxu0 0.0
    %346 = vmatprep.subr.mxu0 0.0
    %347 = vmatpush2.msra.mxu0 0.0
    %348 = vmatprep.subr.mxu0 0.0
    %349 = vmatpush2.msra.mxu0 0.0
    %350 = vmatprep.subr.mxu0 0.0
    %351 = vmatpush2.msra.mxu0 0.0
    %352 = vmatprep.subr.mxu0 0.0
    %353 = vmatpush2.msra.mxu0 0.0
    %354 = vmatprep.subr.mxu0 0.0
    %355 = vmatpush2.msra.mxu0 0.0
    %356 = vmatprep.subr.mxu0 0.0
    %357 = vmatpush2.msra.mxu0 0.0
    %358 = vmatprep.subr.mxu0 0.0
    %359 = vmatpush2.msra.mxu0 0.0
    %360 = vmatprep.subr.mxu0 0.0
    %361 = vmatpush2.msra.mxu0 0.0
    %362 = vmatprep.subr.mxu0 0.0
    %363 = vmatpush2.msra.mxu0 0.0
    %364 = vmatprep.mubr.f32.mxu0 0.0
    %365 = vmatmul.mubr.f32.gmra.mxu0 %v298
    %v366 = vpop.f32.mrf.mxu0
    %v367 = vadd.f32 %v296, %v366
    %v368 = vpop.f32.mrf.mxu0
    %369 = vdwg.mxu0
    %v371 = vsel %vm106, %v294, %v285
    %v372 = vsel %vm193, %v371, 0.0
    %373 = vst [vmem:[#allocation2] sm:$0x1] %v372
    %374 = vrot.lane.b32.xlu0 %v291, 64
    %v375 = vpop.permute.xlu0 %374
    %378 = vrot.lane.b32.xlu0 %v285, 32
    %v379 = vpop.permute.xlu0 %378
    %v381 = vlaneseq
    %v382 = vshrl.u32 %v381, 7
    %v383 = vsub.s32 0, %v382
    %v384 = vrot.slane %v91, %v383
    %385 = vrot.lane.b32.xlu0 %v384, 64
    %v386 = vpop.permute.xlu0 %385
    %v388 = vsel %vm106, %v367, %v375
    %v389 = vsel %vm193, %v388, %v379
    %vm390 = vcmask 785408
    %v391 = vsel %vm390, %v389, %v386
    %392 = vst [vmem:[%s4] sm:$0x1] %v391
    // Predicated region
    $region26: #{attention_decoder_forward.1} parent=1 // pred_check
      _
    $region27: #{attention_decoder_forward.1} parent=1 // pred_check_branch
      %394 = sbr.rel (0) target = $region29
    $region28: #{attention_decoder_forward.1} parent=1 // pred_region
      _
    $region29: #{attention_decoder_forward.1} parent=1 // pred_fallthru
      _
    // Predicated region
    $region30: #{attention_decoder_forward.1} parent=1 // pred_check
      _
    $region31: #{attention_decoder_forward.1} parent=1 // pred_check_branch
      %396 = sbr.rel (0) target = $region33
    $region32: #{attention_decoder_forward.1} parent=1 // pred_region
      _
    $region33: #{attention_decoder_forward.1} parent=1 // pred_fallthru
      _
    %397 = vsyncpa [#allocation5], 1

</llo_original>
